<compile_context>
chip_gen: v7x
topology: tpu7x:2x2x1
jax: 0.10.0
libtpu: 0.0.40
codegen_flags: <defaults>
</compile_context>

<pallas_src>
import numpy as np
import jax
import jax.numpy as jnp
from jax.experimental import pallas as pl
from jax.experimental.pallas import tpu as pltpu

EPS = 1e-5
MARGIN = 16          # zero-row margin around the staged conv2 input (|shift| <= 9)


# ----------------------------------------------------------------------------
# One-time probe of pltpu.roll's rotation direction (runs a tiny kernel once
# at setup; the result is a static Python constant baked into the main kernel,
# so there is zero hot-path cost and the pool-2 rolls are correct under either
# sign convention of the underlying rotate).
# ----------------------------------------------------------------------------
_POOL_SHIFTS = None


def _pool_shifts():
    global _POOL_SHIFTS
    if _POOL_SHIFTS is None:
        probe = jnp.broadcast_to(
            jnp.arange(128, dtype=jnp.float32)[:, None], (128, 128))

        def _probe_kernel(x_ref, o_ref):
            o_ref[...] = pltpu.roll(x_ref[...], 127, 0)

        rolled = pl.pallas_call(
            _probe_kernel,
            out_shape=jax.ShapeDtypeStruct((128, 128), jnp.float32),
        )(probe)
        # jnp.roll convention: out[0] = x[(0 - 127) % 128] = x[1] -> 1.0
        np_convention = abs(float(rolled[0, 0]) - 1.0) < 0.5
        # we want out[r] = y[r + k] for k in (1, 8, 9)
        _POOL_SHIFTS = (127, 120, 119) if np_convention else (1, 8, 9)
    return _POOL_SHIFTS


# ----------------------------------------------------------------------------
# The single fused kernel.
# ----------------------------------------------------------------------------
def _net_kernel(pat_ref, w1_ref, w2_hbm_ref, vecs_ref, fcpk_ref,
                out_ref,
                xbuf_ref, w2buf_ref, w2_sem):
    f32 = jnp.float32

    # Kick off the conv2-weight DMA (HBM -> VMEM) immediately so it overlaps
    # with all of layer 1's compute; we wait only right before the tap loop.
    w2_copy = pltpu.make_async_copy(w2_hbm_ref, w2buf_ref, w2_sem)
    w2_copy.start()

    # ---- layer 1: conv1 (one im2col matmul) + BN1 + ReLU + 2x2 max-pool ----
    # (no conv bias: it cancels under training-mode BN)
    conv1 = jnp.dot(pat_ref[...], w1_ref[...].astype(f32),
                    preferred_element_type=f32)                       # (512, 256)
    n1 = conv1.shape[0]
    mean1 = jnp.sum(conv1, axis=0, keepdims=True) * (1.0 / n1)
    var1 = jnp.maximum(
        jnp.sum(conv1 * conv1, axis=0, keepdims=True) * (1.0 / n1)
        - mean1 * mean1, 0.0)
    scale1 = vecs_ref[0:1, :] * jax.lax.rsqrt(var1 + EPS)             # gamma1
    shift1 = vecs_ref[1:2, :] - mean1 * scale1                        # beta1
    y1 = jnp.maximum(conv1 * scale1 + shift1, 0.0)                    # (512, 256)
    # rows are (ph, pw, b, ho, wo)-ordered -> the 2x2 pool is a max over the
    # four contiguous 128-row phase chunks; result rows land in (b, h, w) order.
    x2 = jnp.maximum(jnp.maximum(y1[0:128, :], y1[128:256, :]),
                     jnp.maximum(y1[256:384, :], y1[384:512, :]))     # (128, 256)

    # ---- stage conv2 input: zero only the margin rows, store the middle ----
    zeros_m = jnp.zeros((MARGIN, 256), f32)
    xbuf_ref[pl.ds(0, MARGIN), :] = zeros_m
    xbuf_ref[pl.ds(MARGIN + 128, MARGIN), :] = zeros_m
    xbuf_ref[pl.ds(MARGIN, 128), :] = x2

    # per-row (128,1) spatial coordinates -- masks are 256x narrower than the
    # old (128,256) per-tap masks and are applied after the tap matmul.
    row = jax.lax.broadcasted_iota(jnp.int32, (128, 1), 0)            # b*64+h*8+w
    hh = (row // 8) % 8
    ww = row % 8

    # conv2 weights must be resident before the tap loop.
    w2_copy.wait()

    # ---- layer 2: conv2 via in-VMEM shifted-tap accumulation ----------------
    acc = jnp.zeros((128, 64), f32)
    for t in range(9):
        oh, ow = t // 3 - 1, t % 3 - 1          # tap offsets in {-1, 0, 1}
        xt = xbuf_ref[pl.ds(MARGIN + oh * 8 + ow, 128), :]            # (128, 256)
        d = jnp.dot(xt, w2buf_ref[t].astype(f32),
                    preferred_element_type=f32)                       # (128, 64)
        if oh == 0 and ow == 0:
            acc = acc + d                        # center tap: always valid
        else:
            ok = None
            if oh != 0:
                ok = (hh + oh >= 0) & (hh + oh < 8)
            if ow != 0:
                okw = (ww + ow >= 0) & (ww + ow < 8)
                ok = okw if ok is None else (ok & okw)
            acc = acc + jnp.where(ok, d, 0.0)    # (128,1) predicate broadcast

    # ---- BN2 + ReLU (no conv bias, same cancellation argument) --------------
    n2 = acc.shape[0]
    mean2 = jnp.sum(acc, axis=0, keepdims=True) * (1.0 / n2)
    var2 = jnp.maximum(
        jnp.sum(acc * acc, axis=0, keepdims=True) * (1.0 / n2)
        - mean2 * mean2, 0.0)
    scale2 = vecs_ref[2:3, 0:64] * jax.lax.rsqrt(var2 + EPS)          # gamma2
    shift2 = vecs_ref[3:4, 0:64] - mean2 * scale2                     # beta2
    y2 = jnp.maximum(acc * scale2 + shift2, 0.0)                      # (128, 64)

    # ---- 2x2 max-pool via XLU rolls (no staging buffer round trip) ----------
    # m[r] = max(y2[r], y2[r+1], y2[r+8], y2[r+9]); wrap-around only corrupts
    # non-representative rows, which wfc zeroes (max representative row is 118).
    s1, s8, s9 = _pool_shifts()
    m = jnp.maximum(jnp.maximum(y2, pltpu.roll(y2, s1, 0)),
                    jnp.maximum(pltpu.roll(y2, s8, 0), pltpu.roll(y2, s9, 0)))

    # ---- Linear(256, 1) over torch's view(B, 4, 256), plus sigmoid ----------
    # out[b, g] = sigmoid( sum_{r,c} m[r,c] * wfc[r,c] * gsel[c,g] * bsel[b,r]
    #                      + bias )
    wfc = fcpk_ref[0:128, 0:64]                                       # (128, 64)
    gsel = fcpk_ref[128:192, 0:4]                                     # (64, 4)
    bsel = fcpk_ref[192:194, :]                                       # (2, 128)
    prod = m * wfc
    z = jnp.dot(prod, gsel, preferred_element_type=f32)               # (128, 4)
    out = jnp.dot(bsel, z, preferred_element_type=f32)                # (2, 4)
    out_ref[...] = jax.nn.sigmoid(out + vecs_ref[4:5, 0:1])


# ----------------------------------------------------------------------------
# One-time weight repacking (hoisted out of the per-call hot path).
# ----------------------------------------------------------------------------
def prepare_params(p):
    # Conv weights in matmul layout, stored bf16 to halve the dominant DMA
    # (they are upcast to f32 inside the kernel; all math stays f32).
    w1m = jnp.transpose(p['w1'], (2, 3, 1, 0)).reshape(9 * 4, 256)
    w1m = w1m.astype(jnp.bfloat16)                                   # (36, 256)
    w2m = jnp.transpose(p['w2'], (2, 3, 1, 0)).reshape(9, 256, 64)
    w2m = w2m.astype(jnp.bfloat16)                                   # (9, 256, 64)
    # NOTE: conv biases b1/b2 are deliberately NOT packed -- training-mode BN
    # subtracts the batch mean, so a pre-BN per-channel bias cancels exactly.

    # Linear(256,1) re-expressed over the (row = b*64 + h*8 + w, col = channel)
    # pooled layout: row r is a pool representative iff h and w are both even;
    # it corresponds to 4x4 position pos = (h//2)*4 + (w//2); channel c lives
    # in view-group g = c//16 with inner index c%16, so it multiplies fc weight
    # wf[(c%16)*16 + pos].  Non-representative rows get weight 0.
    wf_flat = p['wf'].reshape(-1)                                    # (256,)
    r = np.arange(128)
    h, w = (r // 8) % 8, r % 8
    rep = ((h % 2) == 0) & ((w % 2) == 0)
    pos = (h // 2) * 4 + (w // 2)
    c = np.arange(64)
    fc_idx = (c[None, :] % 16) * 16 + pos[:, None]                   # (128, 64)
    wfc = jnp.where(jnp.asarray(rep[:, None]),
                    wf_flat[jnp.asarray(fc_idx)], 0.0).astype(jnp.float32)
    gsel = jnp.asarray((c[:, None] // 16) == np.arange(4)[None, :],
                       jnp.float32)                                  # (64, 4)
    bsel = jnp.asarray((r[None, :] // 64) == np.arange(2)[:, None],
                       jnp.float32)                                  # (2, 128)

    # fcpack (200,128): rows 0:128 lanes 0:64 = wfc, rows 128:192 lanes 0:4 =
    # gsel, rows 192:194 = bsel  (one input instead of three).
    fcpk = jnp.zeros((200, 128), jnp.float32)
    fcpk = fcpk.at[0:128, 0:64].set(wfc)
    fcpk = fcpk.at[128:192, 0:4].set(gsel)
    fcpk = fcpk.at[192:194, :].set(bsel)

    # vecs (8,256): row0=gamma1, row1=beta1, row2=gamma2(pad), row3=beta2(pad),
    # row4 lane0 = fc bias  (one input instead of five).
    vecs = jnp.zeros((8, 256), jnp.float32)
    vecs = vecs.at[0, :].set(p['g1'])
    vecs = vecs.at[1, :].set(p['be1'])
    vecs = vecs.at[2, 0:64].set(p['g2'])
    vecs = vecs.at[3, 0:64].set(p['be2'])
    vecs = vecs.at[4, 0].set(p['bf'][0])

    return dict(w1m=w1m, w2m=w2m, vecs=vecs, fcpk=fcpk)


# ----------------------------------------------------------------------------
# Forward pass: thin XLA prologue (tiny im2col for conv1) + one fused kernel.
# ----------------------------------------------------------------------------
def net_forward(x_nchw, pk):
    B, Cin, H, W = x_nchw.shape
    assert (B, Cin, H, W) == (2, 4, 16, 16)

    # im2col for conv1 (only 72 KiB), rows reordered pool-phase-major so the
    # in-kernel max-pool is a max over four contiguous 128-row chunks.
    x = jnp.transpose(x_nchw, (0, 2, 3, 1))                          # NHWC
    xp = jnp.pad(x, ((0, 0), (1, 1), (1, 1), (0, 0)))
    cols = [xp[:, kh:kh + H, kw:kw + W, :] for kh in range(3) for kw in range(3)]
    pat = jnp.concatenate(cols, axis=-1)                             # (B,H,W,36)
    pat = pat.reshape(B, H // 2, 2, W // 2, 2, 9 * Cin)
    pat = jnp.transpose(pat, (2, 4, 0, 1, 3, 5)).reshape(B * H * W, 9 * Cin)

    out = pl.pallas_call(
        _net_kernel,
        out_shape=jax.ShapeDtypeStruct((2, 4), jnp.float32),
        in_specs=[
            pl.BlockSpec(memory_space=pltpu.MemorySpace.VMEM),   # pat
            pl.BlockSpec(memory_space=pltpu.MemorySpace.VMEM),   # w1m (bf16)
            pl.BlockSpec(memory_space=pl.ANY),                   # w2m stays in HBM
            pl.BlockSpec(memory_space=pltpu.MemorySpace.VMEM),   # vecs
            pl.BlockSpec(memory_space=pltpu.MemorySpace.VMEM),   # fcpack
        ],
        out_specs=pl.BlockSpec(memory_space=pltpu.MemorySpace.VMEM),
        scratch_shapes=[
            pltpu.VMEM((2 * MARGIN + 128, 256), jnp.float32),    # conv2 tap staging
            pltpu.VMEM((9, 256, 64), jnp.bfloat16),              # conv2 weights
            pltpu.SemaphoreType.DMA(()),                         # w2m copy sem
        ],
        compiler_params=pltpu.CompilerParams(
            vmem_limit_bytes=8 * 1024 * 1024),
    )(pat, pk['w1m'], pk['w2m'], pk['vecs'], pk['fcpk'])
    return out.reshape(B, 4, 1)


# ----------------------------------------------------------------------------
# Plain-JAX f32 reference of the module (for an in-script numerical check).
# ----------------------------------------------------------------------------
def reference_forward(x, p):
    hp = jax.lax.Precision.HIGHEST

    def conv(z, w, b):
        y = jax.lax.conv_general_dilated(
            z, w, window_strides=(1, 1), padding=((1, 1), (1, 1)),
            dimension_numbers=('NCHW', 'OIHW', 'NCHW'), precision=hp)
        return y + b.reshape(1, -1, 1, 1)

    def bn(z, g, be):
        mu = jnp.mean(z, axis=(0, 2, 3), keepdims=True)
        var = jnp.mean((z - mu) ** 2, axis=(0, 2, 3), keepdims=True)
        return ((z - mu) * jax.lax.rsqrt(var + EPS) * g.reshape(1, -1, 1, 1)
                + be.reshape(1, -1, 1, 1))

    def pool(z):
        b, cc, hh, ww = z.shape
        return jnp.max(z.reshape(b, cc, hh // 2, 2, ww // 2, 2), axis=(3, 5))

    h = pool(jnp.maximum(bn(conv(x, p['w1'], p['b1']), p['g1'], p['be1']), 0.0))
    h = pool(jnp.maximum(bn(conv(h, p['w2'], p['b2']), p['g2'], p['be2']), 0.0))
    h = h.reshape(h.shape[0], 4, 256)
    return jax.nn.sigmoid(
        jnp.einsum('bgj,jk->bgk', h, p['wf'], precision=hp) + p['bf'])


if __name__ == "__main__":
    key = jax.random.PRNGKey(0)
    ks = jax.random.split(key, 11)
    params = {
        'w1': 0.05 * jax.random.normal(ks[0], (256, 4, 3, 3), jnp.float32),
        'b1': 0.05 * jax.random.normal(ks[1], (256,), jnp.float32),
        'g1': 1.0 + 0.05 * jax.random.normal(ks[2], (256,), jnp.float32),
        'be1': 0.05 * jax.random.normal(ks[3], (256,), jnp.float32),
        'w2': 0.02 * jax.random.normal(ks[4], (64, 256, 3, 3), jnp.float32),
        'b2': 0.05 * jax.random.normal(ks[5], (64,), jnp.float32),
        'g2': 1.0 + 0.05 * jax.random.normal(ks[6], (64,), jnp.float32),
        'be2': 0.05 * jax.random.normal(ks[7], (64,), jnp.float32),
        'wf': 0.05 * jax.random.normal(ks[8], (256, 1), jnp.float32),
        'bf': 0.05 * jax.random.normal(ks[9], (1,), jnp.float32),
    }
    x = jax.random.normal(ks[10], (2, 4, 16, 16), jnp.float32)   # NCHW like torch

    _pool_shifts()                           # one-time rotate-direction probe
    packed = prepare_params(params)          # one-time weight repacking
    fwd = jax.jit(net_forward)
    out = fwd(x, packed)
    jax.block_until_ready(out)

    assert out.shape == (2, 4, 1)
    assert bool(jnp.all(jnp.isfinite(out)))

    # numerical self-check against the plain-JAX f32 reference (the only
    # intentional deviation is bf16 storage of the conv weights; all math is
    # f32, so the deviation stays well below 5e-3 at the sigmoid output)
    ref = reference_forward(x, params)
    max_diff = float(jnp.max(jnp.abs(out - ref)))
    assert max_diff < 5e-3, f"max abs diff {max_diff}"

    print("KERNEL_OK")
</pallas_src>

<mosaic_0001>
module attributes {stable_mosaic.version = 11 : i64} {
  func.func @_probe_kernel(%arg0: memref<128x128xf32, #tpu.memory_space<vmem>>, %arg1: memref<128x128xf32, #tpu.memory_space<vmem>>) attributes {dimension_semantics = [], scalar_prefetch = 0 : i64, scratch_operands = 0 : i64, tpu.core_type = #tpu.core_type<tc>} {
    %c0 = arith.constant 0 : index
    %c0_0 = arith.constant 0 : index
    %0 = vector.load %arg0[%c0, %c0_0] : memref<128x128xf32, #tpu.memory_space<vmem>>, vector<128x128xf32>
    %c127_i32 = arith.constant 127 : i32
    %1 = tpu.dynamic_rotate %0 by %c127_i32 dim 0 : vector<128x128xf32>, i32 -> vector<128x128xf32>
    %c0_1 = arith.constant 0 : index
    %c0_2 = arith.constant 0 : index
    %2 = vector.load %arg1[%c0_1, %c0_2] : memref<128x128xf32, #tpu.memory_space<vmem>>, vector<128x128xf32>
    tpu.vector_store %arg1[%c0_1, %c0_2], %1 {strides = array<i32>} : memref<128x128xf32, #tpu.memory_space<vmem>>, vector<128x128xf32>,
    return
  }
}

</mosaic_0001>

<llo_original>
// kernel: tpu_custom_call.1
$region0: #{tpu_custom_call.1}
  #allocation0 [shape = 'u32[]', space=smem, size = 0x4, offset = 0x4, fixed_abs, tag = 'smem constant byte address 0x4 - core index']
  #allocation1 [shape = 'u32[144,128]{1,0:T(1,128)}', space=vmem, size = 0x12000, scoped, tag = 'internal scratch']
  %s0 = inlined_call_operand.hbm [shape: f32[128,128], index: 0, kind: input, shape index: {}]
  %s1 = inlined_call_operand.hbm [shape: f32[128,128], index: 1, kind: output, shape index: {}]
  %s2 = sld [smem:[#allocation0]]
  $region18: #{tpu_custom_call.1} parent=0
    _
  %s4 = ssub.s32 1, %s2
  %s5 = scalar_select 0, %s4, %s2
  $region1: #{tpu_custom_call.1} parent=0
    #allocation2 [shape = 'u8[65536]{0}', space=vmem, size = 0x10000, scoped, tag = 'input window, operand 0, single buffered']
    #allocation3 [shape = 's32[1]{0}', space=sflag, size = 0x4, scoped, tag = 'scoped memory for tpu_custom_call.1']
    #allocation4 [shape = 's32[1]{0}', space=sflag, size = 0x4, scoped, tag = 'scoped memory for tpu_custom_call.1']
    #allocation5 [shape = 'u8[65536]{0}', space=vmem, size = 0x10000, scoped, tag = 'output window, operand 0, single buffered']
    %6 = vsyncpa [#allocation3], 0
    %7 = vsyncpa [#allocation4], 0
    // Predicated region
    $region2: #{tpu_custom_call.1} parent=1 // pred_check
      _
    $region3: #{tpu_custom_call.1} parent=1 // pred_check_branch
      %9 = sbr.rel (0) target = $region5
    $region4: #{tpu_custom_call.1} parent=1 // pred_region
      %s11 = ssub.s32 2048, 2048
      %12 = vsyncadd [#allocation3], %s11
      %s13 = sshll.u32 [#allocation2], 4
      %s14 = int_to_ptr.vmem [resolvable:$true] %s13
      %19 = dma.hbm_to_vmem [thread:$0]  %s0, 2048, %s14, [#allocation3], 128, 128, 8
    $region5: #{tpu_custom_call.1} parent=1 // pred_fallthru
      _
    // Predicated region
    $region6: #{tpu_custom_call.1} parent=1 // pred_check
      _
    $region7: #{tpu_custom_call.1} parent=1 // pred_check_branch
      %21 = sbr.rel (0) target = $region9
    $region8: #{tpu_custom_call.1} parent=1 // pred_region
      %22 = dma.done [#allocation3], 2048
    $region9: #{tpu_custom_call.1} parent=1 // pred_fallthru
      _
    %v23 = vld [vmem:[#allocation2] sm:$0xff]
    %v24 = vld [vmem:[#allocation2 + $0x8] sm:$0xff]
    %v25 = vld [vmem:[#allocation2 + $0x10] sm:$0xff]
    %v26 = vld [vmem:[#allocation2 + $0x18] sm:$0xff]
    %v27 = vld [vmem:[#allocation2 + $0x20] sm:$0xff]
    %v28 = vld [vmem:[#allocation2 + $0x28] sm:$0xff]
    %v29 = vld [vmem:[#allocation2 + $0x30] sm:$0xff]
    %v30 = vld [vmem:[#allocation2 + $0x38] sm:$0xff]
    %v31 = vld [vmem:[#allocation2 + $0x40] sm:$0xff]
    %v32 = vld [vmem:[#allocation2 + $0x48] sm:$0xff]
    %v33 = vld [vmem:[#allocation2 + $0x50] sm:$0xff]
    %v34 = vld [vmem:[#allocation2 + $0x58] sm:$0xff]
    %v35 = vld [vmem:[#allocation2 + $0x60] sm:$0xff]
    %v36 = vld [vmem:[#allocation2 + $0x68] sm:$0xff]
    %v37 = vld [vmem:[#allocation2 + $0x70] sm:$0xff]
    %v38 = vld [vmem:[#allocation2 + $0x78] sm:$0xff]
    %v39 = vrot.slane %v23, 1
    %v40 = vrot.slane %v24, 1
    %v41 = vrot.slane %v25, 1
    %v42 = vrot.slane %v26, 1
    %v43 = vrot.slane %v27, 1
    %v44 = vrot.slane %v28, 1
    %v45 = vrot.slane %v29, 1
    %v46 = vrot.slane %v30, 1
    %v47 = vrot.slane %v31, 1
    %v48 = vrot.slane %v32, 1
    %v49 = vrot.slane %v33, 1
    %v50 = vrot.slane %v34, 1
    %v51 = vrot.slane %v35, 1
    %v52 = vrot.slane %v36, 1
    %v53 = vrot.slane %v37, 1
    %v54 = vrot.slane %v38, 1
    %v55 = vlaneseq
    %v56 = vshrl.u32 %v55, 7
    %vm57 = vcmp.lt.s32.totalorder %v56, 7
    %v58 = vsel %vm57, %v53, %v54
    %v59 = vsel %vm57, %v52, %v53
    %v60 = vsel %vm57, %v51, %v52
    %v61 = vsel %vm57, %v50, %v51
    %v62 = vsel %vm57, %v49, %v50
    %v63 = vsel %vm57, %v48, %v49
    %v64 = vsel %vm57, %v47, %v48
    %v65 = vsel %vm57, %v46, %v47
    %v66 = vsel %vm57, %v45, %v46
    %v67 = vsel %vm57, %v44, %v45
    %v68 = vsel %vm57, %v43, %v44
    %v69 = vsel %vm57, %v42, %v43
    %v70 = vsel %vm57, %v41, %v42
    %v71 = vsel %vm57, %v40, %v41
    %v72 = vsel %vm57, %v39, %v40
    %v73 = vsel %vm57, %v54, %v39
    %74 = vst [vmem:[#allocation5] sm:$0xff] %v72
    %75 = vst [vmem:[#allocation5 + $0x8] sm:$0xff] %v71
    %76 = vst [vmem:[#allocation5 + $0x10] sm:$0xff] %v70
    %77 = vst [vmem:[#allocation5 + $0x18] sm:$0xff] %v69
    %78 = vst [vmem:[#allocation5 + $0x20] sm:$0xff] %v68
    %79 = vst [vmem:[#allocation5 + $0x28] sm:$0xff] %v67
    %80 = vst [vmem:[#allocation5 + $0x30] sm:$0xff] %v66
    %81 = vst [vmem:[#allocation5 + $0x38] sm:$0xff] %v65
    %82 = vst [vmem:[#allocation5 + $0x40] sm:$0xff] %v64
    %83 = vst [vmem:[#allocation5 + $0x48] sm:$0xff] %v63
    %84 = vst [vmem:[#allocation5 + $0x50] sm:$0xff] %v62
    %85 = vst [vmem:[#allocation5 + $0x58] sm:$0xff] %v61
    %86 = vst [vmem:[#allocation5 + $0x60] sm:$0xff] %v60
    %87 = vst [vmem:[#allocation5 + $0x68] sm:$0xff] %v59
    %88 = vst [vmem:[#allocation5 + $0x70] sm:$0xff] %v58
    %89 = vst [vmem:[#allocation5 + $0x78] sm:$0xff] %v73
    // Predicated region
    $region10: #{tpu_custom_call.1} parent=1 // pred_check
      _
    $region11: #{tpu_custom_call.1} parent=1 // pred_check_branch
      %91 = sbr.rel (0) target = $region13
    $region12: #{tpu_custom_call.1} parent=1 // pred_region
      %s93 = ssub.s32 2048, 2048
      %94 = vsyncadd [#allocation4], %s93
      %s95 = sshll.u32 [#allocation5], 4
      %s96 = int_to_ptr.vmem [resolvable:$true] %s95
      %101 = dma.vmem_to_hbm [thread:$0]  %s96, 2048, %s1, [#allocation4], 128, 128, 8
    $region13: #{tpu_custom_call.1} parent=1 // pred_fallthru
      _
    // Predicated region
    $region14: #{tpu_custom_call.1} parent=1 // pred_check
      _
    $region15: #{tpu_custom_call.1} parent=1 // pred_check_branch
      %103 = sbr.rel (0) target = $region17
    $region16: #{tpu_custom_call.1} parent=1 // pred_region
      %104 = dma.done [#allocation4], 2048
    $region17: #{tpu_custom_call.1} parent=1 // pred_fallthru
      _
    %105 = vsyncpa [#allocation3], 1
    %106 = vsyncpa [#allocation4], 1

</llo_original>
